<compile_context>
chip_gen: v5e
topology: v5e:2x2
jax: 0.10.0
libtpu: 0.0.40
codegen_flags: <defaults>
</compile_context>

<pallas_src>
import math
import jax
import jax.numpy as jnp
from jax.experimental import pallas as pl
from jax.experimental.pallas import tpu as pltpu

EPS = 1e-5
# ~4 MiB h-blocks: good for v6e, amortizes per-step overhead at v7x bandwidth,
# and with explicit vmem_limit_bytes also safe on v5e (16 MiB default scoped VMEM).
BYTES_TARGET = 4 * 1024 * 1024


def _round_up(x, m):
    return -(-x // m) * m


def _choose_tiling(hw, c, bytes_target=BYTES_TARGET):
    """Pick a lane-dense HW tile t (multiple of 128) and padded HW (multiple of t).

    VMEM footprint is computed with C rounded up to 8 sublanes, so the budget is
    honest even for small / ragged channel counts.
    """
    c_sub = _round_up(c, 8)
    max_lanes = max(128, (bytes_target // (c_sub * 4)) // 128 * 128)
    if hw <= max_lanes:
        t = _round_up(hw, 128)
        return t, t                      # single tile per (n, C) row
    n_tiles = -(-hw // max_lanes)        # ceil: number of HW tiles
    t = _round_up(-(-hw // n_tiles), 128)
    return t, t * n_tiles                # pad is at most n_tiles*128 lanes


def _stats_kernel(h_ref, psum_ref, psq_ref):
    # Per-n partial sums; outputs are resident across the HW-tile axis (index_map
    # constant in j) so we accumulate straight into them (P3 pattern, no scratch).
    j = pl.program_id(1)

    @pl.when(j == 0)
    def _():
        psum_ref[...] = jnp.zeros_like(psum_ref)
        psq_ref[...] = jnp.zeros_like(psq_ref)

    h = h_ref[...]                                        # (1, C, t) f32
    # Lane reduce per tile: bulk is vreg-wise VPU adds, only ~C/8 XLU lane-reduces
    # per tile -> nowhere near the 2-XLU slot budget; pass stays HBM-bound.
    psum_ref[...] += jnp.sum(h, axis=2, keepdims=True)    # (1, C, 1)
    psq_ref[...] += jnp.sum(h * h, axis=2, keepdims=True)


def _apply_kernel(h_ref, scale_ref, shift_ref, o_ref):
    # h: (1, C, t); scale/shift: (1, C, 1) -> pure streaming FMA, lane-dense store.
    o_ref[...] = h_ref[...] * scale_ref[...] + shift_ref[...]


def cbn2d_forward(h, y, embed_w, embed_b):
    """h: (N, C, H, W) f32, y: (N, K) f32, embed_w: (2C, K), embed_b: (2C,)."""
    N, C, H, W = h.shape
    HW = H * W
    h3 = h.reshape(N, C, HW)

    # --- embed linear (tiny; plain XLA, contracts over K: no embed_w.T copy) ----
    emb = jax.lax.dot_general(
        y, embed_w,
        dimension_numbers=(((1,), (1,)), ((), ())),
        preferred_element_type=jnp.float32,
    ) + embed_b[None, :]
    gamma = emb[:, :C]                 # (N, C)   chunk(2, dim=1)
    beta = emb[:, C:]                  # (N, C)

    # --- tiling: lane-dense HW tiles, zero-pad ragged HW (exact for the stats) --
    t, hwp = _choose_tiling(HW, C)
    if hwp != HW:
        # One-time copy only when HW is ragged; pad is sliced off after apply.
        h3 = jnp.pad(h3, ((0, 0), (0, 0), (0, hwp - HW)))
    hw_tiles = hwp // t

    # Explicit scoped-VMEM budgets (stats: 2 h-buffers; apply: 2 in + 2 out),
    # floored at 32 MiB (>= any default) and capped to leave v7x 64 MiB headroom.
    block_bytes = _round_up(C, 8) * 4 * t
    stats_vmem = int(min(max(2 * block_bytes + (8 << 20), 32 << 20), 48 << 20))
    apply_vmem = int(min(max(4 * block_bytes + (8 << 20), 32 << 20), 48 << 20))

    # --- pass 1: per-n partial sum / sum-of-squares (N parallel, HW reduction) --
    psum, psq = pl.pallas_call(
        _stats_kernel,
        out_shape=(
            jax.ShapeDtypeStruct((N, C, 1), jnp.float32),
            jax.ShapeDtypeStruct((N, C, 1), jnp.float32),
        ),
        grid=(N, hw_tiles),
        in_specs=[pl.BlockSpec((1, C, t), lambda n, j: (n, 0, j))],
        out_specs=(
            pl.BlockSpec((1, C, 1), lambda n, j: (n, 0, 0)),
            pl.BlockSpec((1, C, 1), lambda n, j: (n, 0, 0)),
        ),
        compiler_params=pltpu.CompilerParams(
            dimension_semantics=("parallel", "arbitrary"),
            vmem_limit_bytes=stats_vmem,
        ),
    )(h3)

    # --- finalize stats in XLA (tiny (N,C) reduction), clamp the variance -------
    count = float(N * HW)                              # real count (excludes pad)
    mean = jnp.sum(psum[:, :, 0], axis=0) / count      # (C,)
    ex2 = jnp.sum(psq[:, :, 0], axis=0) / count        # (C,)
    var = jnp.maximum(ex2 - mean * mean, 0.0)          # guard E[x^2]-mean^2 cancellation
    rstd = jax.lax.rsqrt(var + EPS)

    # --- fold conditional affine + normalization into per-(n, c) scale & shift --
    scale2 = gamma * rstd[None, :]                     # (N, C)
    shift2 = beta - scale2 * mean[None, :]             # (N, C)
    scale3 = scale2.reshape(N, C, 1)
    shift3 = shift2.reshape(N, C, 1)

    # --- pass 2: out = h * scale + shift, tiled & pipelined over (N, HW tiles) --
    # (For very small N*hw_tiles with large C, the grid could additionally tile C
    #  to feed both v7x cores; omitted here to keep arbitrary C robust.)
    out = pl.pallas_call(
        _apply_kernel,
        out_shape=jax.ShapeDtypeStruct((N, C, hwp), jnp.float32),
        grid=(N, hw_tiles),
        in_specs=[
            pl.BlockSpec((1, C, t), lambda n, j: (n, 0, j)),
            pl.BlockSpec((1, C, 1), lambda n, j: (n, 0, 0)),
            pl.BlockSpec((1, C, 1), lambda n, j: (n, 0, 0)),
        ],
        out_specs=pl.BlockSpec((1, C, t), lambda n, j: (n, 0, j)),
        compiler_params=pltpu.CompilerParams(
            dimension_semantics=("parallel", "parallel"),
            vmem_limit_bytes=apply_vmem,
        ),
    )(h3, scale3, shift3)

    if hwp != HW:
        out = out[:, :, :HW]
    return out.reshape(N, C, H, W)


def cbn2d_reference(h, y, embed_w, embed_b):
    C = h.shape[1]
    emb = y @ embed_w.T + embed_b
    gamma = emb[:, :C][:, :, None, None]
    beta = emb[:, C:][:, :, None, None]
    mean = h.mean(axis=(0, 2, 3), keepdims=True)
    var = ((h - mean) ** 2).mean(axis=(0, 2, 3), keepdims=True)
    h_hat = (h - mean) / jnp.sqrt(var + EPS)
    return gamma * h_hat + beta


if __name__ == "__main__":
    N, C, H, W = 2, 4, 16, 16
    n_condition = 128

    key = jax.random.PRNGKey(0)
    k_h, k_y, k_b = jax.random.split(key, 3)

    h = jax.random.normal(k_h, (N, C, H, W), dtype=jnp.float32)
    y = jax.random.normal(k_y, (N, n_condition), dtype=jnp.float32)

    # Parameters, initialized like the PyTorch module's _initialize():
    #   embed.weight[:, :C] = 1, embed.weight[:, C:] = 0
    #   embed.bias: PyTorch Linear default init U(-1/sqrt(K), 1/sqrt(K)).
    embed_w = jnp.zeros((2 * C, n_condition), dtype=jnp.float32)
    embed_w = embed_w.at[:, :C].set(1.0)
    bound = 1.0 / math.sqrt(n_condition)
    embed_b = jax.random.uniform(
        k_b, (2 * C,), dtype=jnp.float32, minval=-bound, maxval=bound
    )

    # TODO(synk): PyTorch's running_mean/running_var buffer updates (training-mode
    # side effects of nn.BatchNorm2d) are intentionally not reproduced.
    out = jax.jit(cbn2d_forward)(h, y, embed_w, embed_b)
    out = jax.block_until_ready(out)

    ref = cbn2d_reference(h, y, embed_w, embed_b)
    assert out.shape == (N, C, H, W)
    assert jnp.allclose(out, ref, atol=1e-4, rtol=1e-4), "mismatch vs reference"

    print("KERNEL_OK")
</pallas_src>

<mosaic_0001>
module attributes {stable_mosaic.version = 11 : i64} {
  func.func @_apply_kernel(%arg0: i32, %arg1: i32, %arg2: memref<1x4x256xf32, #tpu.memory_space<vmem>>, %arg3: memref<1x4x1xf32, #tpu.memory_space<vmem>>, %arg4: memref<1x4x1xf32, #tpu.memory_space<vmem>>, %arg5: memref<1x4x256xf32, #tpu.memory_space<vmem>>) attributes {dimension_semantics = [#tpu.dimension_semantics<parallel>, #tpu.dimension_semantics<parallel>], iteration_bounds = array<i64: 2, 1>, scalar_prefetch = 0 : i64, scratch_operands = 0 : i64, tpu.core_type = #tpu.core_type<tc>, window_params = [{transform_indices = @transform_0, window_bounds = array<i64: 1, 4, 256>}, {transform_indices = @transform_1, window_bounds = array<i64: 1, 4, 1>}, {transform_indices = @transform_2, window_bounds = array<i64: 1, 4, 1>}, {transform_indices = @transform_3, window_bounds = array<i64: 1, 4, 256>}]} {
    %c0 = arith.constant 0 : index
    %c0_0 = arith.constant 0 : index
    %c0_1 = arith.constant 0 : index
    %0 = vector.load %arg2[%c0, %c0_0, %c0_1] : memref<1x4x256xf32, #tpu.memory_space<vmem>>, vector<1x4x256xf32>
    %c0_2 = arith.constant 0 : index
    %c0_3 = arith.constant 0 : index
    %c0_4 = arith.constant 0 : index
    %1 = vector.load %arg3[%c0_2, %c0_3, %c0_4] : memref<1x4x1xf32, #tpu.memory_space<vmem>>, vector<1x4x1xf32>
    %2 = vector.broadcast %1 : vector<1x4x1xf32> to vector<1x4x256xf32>
    %3 = arith.mulf %0, %2 : vector<1x4x256xf32>
    %c0_5 = arith.constant 0 : index
    %c0_6 = arith.constant 0 : index
    %c0_7 = arith.constant 0 : index
    %4 = vector.load %arg4[%c0_5, %c0_6, %c0_7] : memref<1x4x1xf32, #tpu.memory_space<vmem>>, vector<1x4x1xf32>
    %5 = vector.broadcast %4 : vector<1x4x1xf32> to vector<1x4x256xf32>
    %6 = arith.addf %3, %5 : vector<1x4x256xf32>
    %c0_8 = arith.constant 0 : index
    %c0_9 = arith.constant 0 : index
    %c0_10 = arith.constant 0 : index
    %7 = vector.load %arg5[%c0_8, %c0_9, %c0_10] : memref<1x4x256xf32, #tpu.memory_space<vmem>>, vector<1x4x256xf32>
    tpu.vector_store %arg5[%c0_8, %c0_9, %c0_10], %6 {strides = array<i32>} : memref<1x4x256xf32, #tpu.memory_space<vmem>>, vector<1x4x256xf32>,
    return
  }
  func.func @transform_0(%arg0: i32, %arg1: i32) -> (i32, i32, i32) {
    %c0_i32 = arith.constant 0 : i32
    %c0_i32_0 = arith.constant 0 : i32
    return %arg0, %c0_i32, %arg1 : i32, i32, i32
  }
  func.func @transform_1(%arg0: i32, %arg1: i32) -> (i32, i32, i32) {
    %c0_i32 = arith.constant 0 : i32
    %c0_i32_0 = arith.constant 0 : i32
    %c0_i32_1 = arith.constant 0 : i32
    return %arg0, %c0_i32, %c0_i32_0 : i32, i32, i32
  }
  func.func @transform_2(%arg0: i32, %arg1: i32) -> (i32, i32, i32) {
    %c0_i32 = arith.constant 0 : i32
    %c0_i32_0 = arith.constant 0 : i32
    %c0_i32_1 = arith.constant 0 : i32
    return %arg0, %c0_i32, %c0_i32_0 : i32, i32, i32
  }
  func.func @transform_3(%arg0: i32, %arg1: i32) -> (i32, i32, i32) {
    %c0_i32 = arith.constant 0 : i32
    %c0_i32_0 = arith.constant 0 : i32
    return %arg0, %c0_i32, %arg1 : i32, i32, i32
  }
}

module attributes {stable_mosaic.version = 11 : i64} {
  func.func @_stats_kernel(%arg0: i32, %arg1: i32, %arg2: memref<1x4x256xf32, #tpu.memory_space<vmem>>, %arg3: memref<1x4x1xf32, #tpu.memory_space<vmem>>, %arg4: memref<1x4x1xf32, #tpu.memory_space<vmem>>) attributes {dimension_semantics = [#tpu.dimension_semantics<parallel>, #tpu.dimension_semantics<arbitrary>], iteration_bounds = array<i64: 2, 1>, scalar_prefetch = 0 : i64, scratch_operands = 0 : i64, tpu.core_type = #tpu.core_type<tc>, window_params = [{transform_indices = @transform_0, window_bounds = array<i64: 1, 4, 256>}, {transform_indices = @transform_1, window_bounds = array<i64: 1, 4, 1>}, {transform_indices = @transform_2, window_bounds = array<i64: 1, 4, 1>}]} {
    %c0_i32 = arith.constant 0 : i32
    %0 = arith.cmpi eq, %arg1, %c0_i32 : i32
    %1 = arith.extui %0 : i1 to i32
    %c0_i32_0 = arith.constant 0 : i32
    %2 = arith.cmpi ne, %1, %c0_i32_0 : i32
    scf.if %2 {
      %cst_16 = arith.constant 0.000000e+00 : f32
      %15 = vector.broadcast %cst_16 : f32 to vector<1x4x1xf32>
      %c0_17 = arith.constant 0 : index
      %c0_18 = arith.constant 0 : index
      %c0_19 = arith.constant 0 : index
      %16 = vector.load %arg3[%c0_17, %c0_18, %c0_19] : memref<1x4x1xf32, #tpu.memory_space<vmem>>, vector<1x4x1xf32>
      tpu.vector_store %arg3[%c0_17, %c0_18, %c0_19], %15 {strides = array<i32>} : memref<1x4x1xf32, #tpu.memory_space<vmem>>, vector<1x4x1xf32>,
      %cst_20 = arith.constant 0.000000e+00 : f32
      %17 = vector.broadcast %cst_20 : f32 to vector<1x4x1xf32>
      %c0_21 = arith.constant 0 : index
      %c0_22 = arith.constant 0 : index
      %c0_23 = arith.constant 0 : index
      %18 = vector.load %arg4[%c0_21, %c0_22, %c0_23] : memref<1x4x1xf32, #tpu.memory_space<vmem>>, vector<1x4x1xf32>
      tpu.vector_store %arg4[%c0_21, %c0_22, %c0_23], %17 {strides = array<i32>} : memref<1x4x1xf32, #tpu.memory_space<vmem>>, vector<1x4x1xf32>,
    } else {
    }
    %c0 = arith.constant 0 : index
    %c0_1 = arith.constant 0 : index
    %c0_2 = arith.constant 0 : index
    %3 = vector.load %arg2[%c0, %c0_1, %c0_2] : memref<1x4x256xf32, #tpu.memory_space<vmem>>, vector<1x4x256xf32>
    %c0_3 = arith.constant 0 : index
    %c0_4 = arith.constant 0 : index
    %c0_5 = arith.constant 0 : index
    %4 = vector.load %arg3[%c0_3, %c0_4, %c0_5] : memref<1x4x1xf32, #tpu.memory_space<vmem>>, vector<1x4x1xf32>
    %cst = arith.constant dense<0.000000e+00> : vector<1x4xf32>
    %5 = vector.multi_reduction <add>, %3, %cst [2] : vector<1x4x256xf32> to vector<1x4xf32>
    %6 = vector.shape_cast %5 : vector<1x4xf32> to vector<1x4x1xf32>
    %7 = arith.addf %4, %6 : vector<1x4x1xf32>
    %c0_6 = arith.constant 0 : index
    %c0_7 = arith.constant 0 : index
    %c0_8 = arith.constant 0 : index
    %8 = vector.load %arg3[%c0_6, %c0_7, %c0_8] : memref<1x4x1xf32, #tpu.memory_space<vmem>>, vector<1x4x1xf32>
    tpu.vector_store %arg3[%c0_6, %c0_7, %c0_8], %7 {strides = array<i32>} : memref<1x4x1xf32, #tpu.memory_space<vmem>>, vector<1x4x1xf32>,
    %c0_9 = arith.constant 0 : index
    %c0_10 = arith.constant 0 : index
    %c0_11 = arith.constant 0 : index
    %9 = vector.load %arg4[%c0_9, %c0_10, %c0_11] : memref<1x4x1xf32, #tpu.memory_space<vmem>>, vector<1x4x1xf32>
    %10 = arith.mulf %3, %3 : vector<1x4x256xf32>
    %cst_12 = arith.constant dense<0.000000e+00> : vector<1x4xf32>
    %11 = vector.multi_reduction <add>, %10, %cst_12 [2] : vector<1x4x256xf32> to vector<1x4xf32>
    %12 = vector.shape_cast %11 : vector<1x4xf32> to vector<1x4x1xf32>
    %13 = arith.addf %9, %12 : vector<1x4x1xf32>
    %c0_13 = arith.constant 0 : index
    %c0_14 = arith.constant 0 : index
    %c0_15 = arith.constant 0 : index
    %14 = vector.load %arg4[%c0_13, %c0_14, %c0_15] : memref<1x4x1xf32, #tpu.memory_space<vmem>>, vector<1x4x1xf32>
    tpu.vector_store %arg4[%c0_13, %c0_14, %c0_15], %13 {strides = array<i32>} : memref<1x4x1xf32, #tpu.memory_space<vmem>>, vector<1x4x1xf32>,
    return
  }
  func.func @transform_0(%arg0: i32, %arg1: i32) -> (i32, i32, i32) {
    %c0_i32 = arith.constant 0 : i32
    %c0_i32_0 = arith.constant 0 : i32
    return %arg0, %c0_i32, %arg1 : i32, i32, i32
  }
  func.func @transform_1(%arg0: i32, %arg1: i32) -> (i32, i32, i32) {
    %c0_i32 = arith.constant 0 : i32
    %c0_i32_0 = arith.constant 0 : i32
    %c0_i32_1 = arith.constant 0 : i32
    return %arg0, %c0_i32, %c0_i32_0 : i32, i32, i32
  }
  func.func @transform_2(%arg0: i32, %arg1: i32) -> (i32, i32, i32) {
    %c0_i32 = arith.constant 0 : i32
    %c0_i32_0 = arith.constant 0 : i32
    %c0_i32_1 = arith.constant 0 : i32
    return %arg0, %c0_i32, %c0_i32_0 : i32, i32, i32
  }
}

</mosaic_0001>

<llo_original>
// kernel: cbn2d_forward.3
$region0: #{cbn2d_forward.3}
  #allocation0 [shape = 'u32[]', space=smem, size = 0x4, offset = 0x4, fixed_abs, tag = 'smem constant byte address 0x4 - core index']
  #allocation1 [shape = 'u32[72,128]{1,0:T(1,128)}', space=vmem, size = 0x9000, scoped, tag = 'internal scratch']
  %s0 = inlined_call_operand.vmem [shape: f32[2,4,256], index: 0, kind: input, shape index: {}]
  %s1 = inlined_call_operand.vmem [shape: f32[2,4,1], index: 1, kind: input, shape index: {}]
  %s2 = inlined_call_operand.vmem [shape: f32[2,4,1], index: 2, kind: input, shape index: {}]
  %s3 = inlined_call_operand.vmem [shape: f32[2,4,256], index: 3, kind: output, shape index: {}]
  %s4 = sld [smem:[#allocation0]]
  $region45: #{cbn2d_forward.3} parent=0
    _
  %s6 = ssub.s32 1, %s4
  %s7 = scalar_select 0, %s6, %s4
  loop: start=0, step=1, limit=4
  $region2: #{cbn2d_forward.3} parent=0 // loop_pre_header
    _
  $region3: #{cbn2d_forward.3} parent=0 // loop_header
    %s9 = sphi 0, %s13
    %p10 = scmp.ge.s32.totalorder %s9, 4
    %s16 = sphi 0, %s28
    %s17 = sphi 0, %s24
    %s18 = sphi 0, %s16
    %s19 = sphi 0, %s17
    %s20 = sphi 0, %s18
    %s21 = sphi 0, %s19
    %s33 = sphi 0, %s35
    %s36 = sphi 0, %s33
    %s37 = sphi 0, %s36
    %s53 = sphi 0, %s37
    %s59 = sphi 0, %s61
    %s62 = sphi 0, %s59
    %s63 = sphi 0, %s62
    %s79 = sphi 0, %s63
    %s85 = sphi 0, %s87
    %s88 = sphi 0, %s85
    %s89 = sphi 0, %s88
    %s105 = sphi 0, %s89
    %s113 = sphi 0, %s115
    %s116 = sphi 0, %s113
    %s117 = sphi 0, %s116
    %s133 = sphi 0, %s117
  $region4: #{cbn2d_forward.3} parent=0 // loop_header_branch
    %12 = sbr.rel (%p10) target = $region8
  $region5: #{cbn2d_forward.3} parent=0 // loop_body
    %s14 = ssub.s32 %s9, 1
    %s15 = ssub.s32 %s9, 2
    %s22 = sadd.s32 1, %s17
    %p23 = scmp.ge.s32.totalorder %s22, 1
    %s24 = scalar_select %p23, 0, %s22
    %s25 = sadd.s32 1, %s16
    %s26 = scalar_select %p23, %s25, %s16
    %p27 = scmp.ge.s32.totalorder %s26, 2
    %s28 = scalar_select %p27, 0, %s26
    %s29 = ssub.s32 %s16, %s28
    %s30 = ssub.s32 %s17, %s24
    %s31 = sor.u32 %s29, %s30
    %p32 = scmp.eq.s32.totalorder %s31, 0
    %s34 = sadd.s32 %s33, 1
    %s35 = scalar_select %p32, %s33, %s34
    %p38 = pneg %p32
    %p39 = scmp.eq.s32.totalorder %s9, 1
    %p40 = por %p38, %p39
    %p41 = scmp.ne.s32.totalorder %s33, %s36
    %p42 = scmp.eq.s32.totalorder %s9, 0
    %p43 = por %p41, %p42
    %p44 = scmp.ne.s32.totalorder %s33, %s36
    %p45 = scmp.eq.s32.totalorder %s14, 1
    %p46 = por %p44, %p45
    %p47 = scmp.ne.s32.totalorder %s36, %s37
    %p48 = scmp.eq.s32.totalorder %s14, 0
    %p49 = por %p47, %p48
    %p50 = scmp.ne.s32.totalorder %s36, %s37
    %p51 = scmp.eq.s32.totalorder %s15, 1
    %p52 = por %p50, %p51
    %p54 = scmp.ne.s32.totalorder %s37, %s53
    %p55 = scmp.eq.s32.totalorder %s15, 0
    %p56 = por %p54, %p55
    %s57 = ssub.s32 %s16, %s28
    %p58 = scmp.eq.s32.totalorder %s57, 0
    %s60 = sadd.s32 %s59, 1
    %s61 = scalar_select %p58, %s59, %s60
    %p64 = pneg %p58
    %p65 = scmp.eq.s32.totalorder %s9, 1
    %p66 = por %p64, %p65
    %p67 = scmp.ne.s32.totalorder %s59, %s62
    %p68 = scmp.eq.s32.totalorder %s9, 0
    %p69 = por %p67, %p68
    %p70 = scmp.ne.s32.totalorder %s59, %s62
    %p71 = scmp.eq.s32.totalorder %s14, 1
    %p72 = por %p70, %p71
    %p73 = scmp.ne.s32.totalorder %s62, %s63
    %p74 = scmp.eq.s32.totalorder %s14, 0
    %p75 = por %p73, %p74
    %p76 = scmp.ne.s32.totalorder %s62, %s63
    %p77 = scmp.eq.s32.totalorder %s15, 1
    %p78 = por %p76, %p77
    %p80 = scmp.ne.s32.totalorder %s63, %s79
    %p81 = scmp.eq.s32.totalorder %s15, 0
    %p82 = por %p80, %p81
    %s83 = ssub.s32 %s16, %s28
    %p84 = scmp.eq.s32.totalorder %s83, 0
    %s86 = sadd.s32 %s85, 1
    %s87 = scalar_select %p84, %s85, %s86
    %p90 = pneg %p84
    %p91 = scmp.eq.s32.totalorder %s9, 1
    %p92 = por %p90, %p91
    %p93 = scmp.ne.s32.totalorder %s85, %s88
    %p94 = scmp.eq.s32.totalorder %s9, 0
    %p95 = por %p93, %p94
    %p96 = scmp.ne.s32.totalorder %s85, %s88
    %p97 = scmp.eq.s32.totalorder %s14, 1
    %p98 = por %p96, %p97
    %p99 = scmp.ne.s32.totalorder %s88, %s89
    %p100 = scmp.eq.s32.totalorder %s14, 0
    %p101 = por %p99, %p100
    %p102 = scmp.ne.s32.totalorder %s88, %s89
    %p103 = scmp.eq.s32.totalorder %s15, 1
    %p104 = por %p102, %p103
    %p106 = scmp.ne.s32.totalorder %s89, %s105
    %p107 = scmp.eq.s32.totalorder %s15, 0
    %p108 = por %p106, %p107
    %s109 = ssub.s32 %s16, %s28
    %s110 = ssub.s32 %s17, %s24
    %s111 = sor.u32 %s109, %s110
    %p112 = scmp.eq.s32.totalorder %s111, 0
    %s114 = sadd.s32 %s113, 1
    %s115 = scalar_select %p112, %s113, %s114
    %p118 = pneg %p112
    %p119 = scmp.eq.s32.totalorder %s9, 1
    %p120 = por %p118, %p119
    %p121 = scmp.ne.s32.totalorder %s113, %s116
    %p122 = scmp.eq.s32.totalorder %s9, 0
    %p123 = por %p121, %p122
    %p124 = scmp.ne.s32.totalorder %s113, %s116
    %p125 = scmp.eq.s32.totalorder %s14, 1
    %p126 = por %p124, %p125
    %p127 = scmp.ne.s32.totalorder %s116, %s117
    %p128 = scmp.eq.s32.totalorder %s14, 0
    %p129 = por %p127, %p128
    %p130 = scmp.ne.s32.totalorder %s116, %s117
    %p131 = scmp.eq.s32.totalorder %s15, 1
    %p132 = por %p130, %p131
    %p134 = scmp.ne.s32.totalorder %s117, %s133
    %p135 = scmp.eq.s32.totalorder %s15, 0
    %p136 = por %p134, %p135
    %p137 = scmp.le.s32.totalorder 1, %s9
    %p138 = scmp.lt.s32.totalorder %s9, 3
    %p139 = pnand %p137, %p138
    %p140 = pneg %p139
    // Predicated region
    $region9: #{cbn2d_forward.3} parent=5 // pred_check
      _
    $region10: #{cbn2d_forward.3} parent=5 // pred_check_branch
      %142 = sbr.rel (%p139) target = $region12
    $region11: #{cbn2d_forward.3} parent=5 // pred_region
      %s143 = ssub.s32 %s9, 1
    $region12: #{cbn2d_forward.3} parent=5 // pred_fallthru
      _
    %p144 = scmp.lt.s32.totalorder %s9, 2
    // Predicated region
    $region13: #{cbn2d_forward.3} parent=5 // pred_check
      %p145 = pneg %p144
    $region14: #{cbn2d_forward.3} parent=5 // pred_check_branch
      %147 = sbr.rel (%p145) target = $region16
    $region15: #{cbn2d_forward.3} parent=5 // pred_region
      // Predicated region
      $region17: #{cbn2d_forward.3} parent=15 // pred_check
        %p148 = pneg %p43
      $region18: #{cbn2d_forward.3} parent=15 // pred_check_branch
        %150 = sbr.rel (%p148) target = $region20
      $region19: #{cbn2d_forward.3} parent=15 // pred_region
        %s151 = smul.u32 2, %s17
        %p152 = scmp.lt.s32.totalorder %s16, 1
        %s153 = scalar_select %p152, %s16, 1
        %p154 = scmp.lt.s32.totalorder %s151, 1
        %s155 = scalar_select %p154, %s151, 1
        %s156 = smul.addr %s153, 2
        %s157 = sadd.s32 %s155, %s156
        %s158 = smul.addr %s157, 4
        %s159 = scalar_lea.vmem %s0, %s158
        %s160 = smul.u32 2, %s17
      $region20: #{cbn2d_forward.3} parent=15 // pred_fallthru
        _
      // Predicated region
      $region21: #{cbn2d_forward.3} parent=15 // pred_check
        %p161 = pneg %p69
      $region22: #{cbn2d_forward.3} parent=15 // pred_check_branch
        %163 = sbr.rel (%p161) target = $region24
      $region23: #{cbn2d_forward.3} parent=15 // pred_region
        %p164 = scmp.lt.s32.totalorder %s16, 1
        %s165 = scalar_select %p164, %s16, 1
        %s166 = smul.addr %s165, 4
        %s167 = scalar_lea.vmem %s1, %s166
      $region24: #{cbn2d_forward.3} parent=15 // pred_fallthru
        _
      // Predicated region
      $region25: #{cbn2d_forward.3} parent=15 // pred_check
        %p168 = pneg %p95
      $region26: #{cbn2d_forward.3} parent=15 // pred_check_branch
        %170 = sbr.rel (%p168) target = $region28
      $region27: #{cbn2d_forward.3} parent=15 // pred_region
        %p171 = scmp.lt.s32.totalorder %s16, 1
        %s172 = scalar_select %p171, %s16, 1
        %s173 = smul.addr %s172, 4
        %s174 = scalar_lea.vmem %s2, %s173
      $region28: #{cbn2d_forward.3} parent=15 // pred_fallthru
        _
    $region16: #{cbn2d_forward.3} parent=5 // pred_fallthru
      _
    %p175 = scmp.le.s32.totalorder 1, %s9
    %p176 = scmp.lt.s32.totalorder %s9, 3
    %p177 = pnand %p175, %p176
    %p178 = pneg %p177
    // Predicated region
    $region29: #{cbn2d_forward.3} parent=5 // pred_check
      _
    $region30: #{cbn2d_forward.3} parent=5 // pred_check_branch
      %180 = sbr.rel (%p177) target = $region32
    $region31: #{cbn2d_forward.3} parent=5 // pred_region
      %s181 = ssub.s32 %s9, 1
      %s182 = smul.u32 2, %s19
      %p183 = scmp.lt.s32.totalorder %s18, 1
      %s184 = scalar_select %p183, %s18, 1
      %p185 = scmp.lt.s32.totalorder %s182, 1
      %s186 = scalar_select %p185, %s182, 1
      %s187 = smul.addr %s184, 2
      %s188 = sadd.s32 %s186, %s187
      %s189 = smul.addr %s188, 4
      %s190 = scalar_lea.vmem %s0, %s189
      %p191 = pneg %p49
      %p192 = pneg %p46
      %p193 = scmp.lt.s32.totalorder %s18, 1
      %s194 = scalar_select %p193, %s18, 1
      %s195 = smul.addr %s194, 4
      %s196 = scalar_lea.vmem %s1, %s195
      %p197 = pneg %p75
      %p198 = pneg %p72
      %p199 = scmp.lt.s32.totalorder %s18, 1
      %s200 = scalar_select %p199, %s18, 1
      %s201 = smul.addr %s200, 4
      %s202 = scalar_lea.vmem %s2, %s201
      %p203 = pneg %p101
      %p204 = pneg %p98
      %p205 = pneg %p129
      %p206 = pneg %p126
      %s207 = smul.u32 2, %s19
      %p208 = scmp.lt.s32.totalorder %s18, 1
      %s209 = scalar_select %p208, %s18, 1
      %p210 = scmp.lt.s32.totalorder %s207, 1
      %s211 = scalar_select %p210, %s207, 1
      %s212 = smul.addr %s209, 2
      %s213 = sadd.s32 %s211, %s212
      %s214 = smul.addr %s213, 4
      %s215 = scalar_lea.vmem %s3, %s214
      %s216 = smul.u32 2, %s19
      %p217 = scmp.lt.s32.totalorder %s18, 1
      %s218 = scalar_select %p217, %s18, 1
      %p219 = scmp.lt.s32.totalorder %s216, 1
      %s220 = scalar_select %p219, %s216, 1
      %s221 = smul.addr %s218, 2
      %s222 = sadd.s32 %s220, %s221
      %s223 = smul.addr %s222, 4
      %s224 = scalar_lea.vmem %s0, %s223
      %s225 = smul.u32 2, %s19
      %p226 = scmp.lt.s32.totalorder %s18, 1
      %s227 = scalar_select %p226, %s18, 1
      %s228 = smul.addr %s227, 4
      %s229 = scalar_lea.vmem %s1, %s228
      %p230 = scmp.lt.s32.totalorder %s18, 1
      %s231 = scalar_select %p230, %s18, 1
      %s232 = smul.addr %s231, 4
      %s233 = scalar_lea.vmem %s2, %s232
      %s234 = smul.u32 2, %s19
      %p235 = scmp.lt.s32.totalorder %s18, 1
      %s236 = scalar_select %p235, %s18, 1
      %p237 = scmp.lt.s32.totalorder %s234, 1
      %s238 = scalar_select %p237, %s234, 1
      %s239 = smul.addr %s236, 2
      %s240 = sadd.s32 %s238, %s239
      %s241 = smul.addr %s240, 4
      %s242 = scalar_lea.vmem %s3, %s241
      %s243 = smul.u32 2, %s19
      %v244 = vld [vmem:[%s224] sm:$0xff]
      %v245 = vld [vmem:[%s229] sm:$0xf]
      %247 = vset.pattern.permute.xlu0 0
      %248 = vperm.xlu0 %247, %v245
      %v249 = vpop.permute.xlu0 %248
      %v251 = vunpack.c.l.s4 839922192
      %v252 = vunpack.c.0.s8 %v251
      %v253 = vperm.slane %v249, %v252
      %v255 = vmul.f32 %v244, %v253
      %v256 = vld [vmem:[%s233] sm:$0xf]
      %258 = vset.pattern.permute.xlu0 0
      %259 = vperm.xlu0 %258, %v256
      %v260 = vpop.permute.xlu0 %259
      %v262 = vunpack.c.l.s4 839922192
      %v263 = vunpack.c.0.s8 %v262
      %v264 = vperm.slane %v260, %v263
      %v266 = vadd.f32 %v255, %v264
      %267 = vst [vmem:[%s242] sm:$0xff] %v266
      %s268 = smul.u32 2, %s19
      %p269 = scmp.lt.s32.totalorder %s18, 1
      %s270 = scalar_select %p269, %s18, 1
      %p271 = scmp.lt.s32.totalorder %s268, 1
      %s272 = scalar_select %p271, %s268, 1
      %s273 = smul.addr %s270, 2
      %s274 = sadd.s32 %s272, %s273
      %s275 = smul.addr %s274, 4
      %s276 = scalar_lea.vmem %s3, %s275
      // Predicated region
      $region33: #{cbn2d_forward.3} parent=31 // pred_check
        %p277 = pneg %p126
      $region34: #{cbn2d_forward.3} parent=31 // pred_check_branch
        %279 = sbr.rel (%p277) target = $region36
      $region35: #{cbn2d_forward.3} parent=31 // pred_region
        %s280 = smul.u32 2, %s19
      $region36: #{cbn2d_forward.3} parent=31 // pred_fallthru
        _
    $region32: #{cbn2d_forward.3} parent=5 // pred_fallthru
      _
    %p281 = scmp.le.s32.totalorder 2, %s9
    // Predicated region
    $region37: #{cbn2d_forward.3} parent=5 // pred_check
      %p282 = pneg %p281
    $region38: #{cbn2d_forward.3} parent=5 // pred_check_branch
      %284 = sbr.rel (%p282) target = $region40
    $region39: #{cbn2d_forward.3} parent=5 // pred_region
      %s285 = ssub.s32 %s9, 2
      // Predicated region
      $region41: #{cbn2d_forward.3} parent=39 // pred_check
        %p286 = pneg %p132
      $region42: #{cbn2d_forward.3} parent=39 // pred_check_branch
        %288 = sbr.rel (%p286) target = $region44
      $region43: #{cbn2d_forward.3} parent=39 // pred_region
        %s289 = smul.u32 2, %s21
        %p290 = scmp.lt.s32.totalorder %s20, 1
        %s291 = scalar_select %p290, %s20, 1
        %p292 = scmp.lt.s32.totalorder %s289, 1
        %s293 = scalar_select %p292, %s289, 1
        %s294 = smul.addr %s291, 2
        %s295 = sadd.s32 %s293, %s294
        %s296 = smul.addr %s295, 4
        %s297 = scalar_lea.vmem %s3, %s296
      $region44: #{cbn2d_forward.3} parent=39 // pred_fallthru
        _
    $region40: #{cbn2d_forward.3} parent=5 // pred_fallthru
      _
  $region6: #{cbn2d_forward.3} parent=0 // loop_footer
    %s13 = sadd.s32 1, %s9
  $region7: #{cbn2d_forward.3} parent=0 // loop_footer_branch
    %8 = sbr.rel target = $region3
  $region8: #{cbn2d_forward.3} parent=0 // loop_exit
    _

// kernel: cbn2d_forward.2
$region0: #{cbn2d_forward.2}
  #allocation0 [shape = 'u32[]', space=smem, size = 0x4, offset = 0x4, fixed_abs, tag = 'smem constant byte address 0x4 - core index']
  #allocation1 [shape = 'u32[72,128]{1,0:T(1,128)}', space=vmem, size = 0x9000, scoped, tag = 'internal scratch']
  %s0 = inlined_call_operand.vmem [shape: f32[2,4,256], index: 0, kind: input, shape index: {}]
  %s1 = inlined_call_operand.vmem [shape: f32[2,4,1], index: 1, kind: output, shape index: {0}]
  %s2 = inlined_call_operand.vmem [shape: f32[2,4,1], index: 2, kind: output, shape index: {1}]
  %3 = xla_tuple %s1, %s2
  %s4 = sld [smem:[#allocation0]]
  $region49: #{cbn2d_forward.2} parent=0
    _
  %s6 = ssub.s32 1, %s4
  %s7 = scalar_select 0, %s6, %s4
  loop: start=0, step=1, limit=4
  $region2: #{cbn2d_forward.2} parent=0 // loop_pre_header
    _
  $region3: #{cbn2d_forward.2} parent=0 // loop_header
    %s9 = sphi 0, %s13
    %p10 = scmp.ge.s32.totalorder %s9, 4
    %s16 = sphi 0, %s28
    %s17 = sphi 0, %s24
    %s18 = sphi 0, %s16
    %s19 = sphi 0, %s17
    %s20 = sphi 0, %s18
    %s21 = sphi 0, %s19
    %s33 = sphi 0, %s35
    %s36 = sphi 0, %s33
    %s37 = sphi 0, %s36
    %s53 = sphi 0, %s37
    %s59 = sphi 0, %s61
    %s62 = sphi 0, %s59
    %s63 = sphi 0, %s62
    %s79 = sphi 0, %s63
    %s85 = sphi 0, %s87
    %s88 = sphi 0, %s85
    %s89 = sphi 0, %s88
    %s105 = sphi 0, %s89
  $region4: #{cbn2d_forward.2} parent=0 // loop_header_branch
    %12 = sbr.rel (%p10) target = $region8
  $region5: #{cbn2d_forward.2} parent=0 // loop_body
    %s14 = ssub.s32 %s9, 1
    %s15 = ssub.s32 %s9, 2
    %s22 = sadd.s32 1, %s17
    %p23 = scmp.ge.s32.totalorder %s22, 1
    %s24 = scalar_select %p23, 0, %s22
    %s25 = sadd.s32 1, %s16
    %s26 = scalar_select %p23, %s25, %s16
    %p27 = scmp.ge.s32.totalorder %s26, 2
    %s28 = scalar_select %p27, 0, %s26
    %s29 = ssub.s32 %s16, %s28
    %s30 = ssub.s32 %s17, %s24
    %s31 = sor.u32 %s29, %s30
    %p32 = scmp.eq.s32.totalorder %s31, 0
    %s34 = sadd.s32 %s33, 1
    %s35 = scalar_select %p32, %s33, %s34
    %p38 = pneg %p32
    %p39 = scmp.eq.s32.totalorder %s9, 1
    %p40 = por %p38, %p39
    %p41 = scmp.ne.s32.totalorder %s33, %s36
    %p42 = scmp.eq.s32.totalorder %s9, 0
    %p43 = por %p41, %p42
    %p44 = scmp.ne.s32.totalorder %s33, %s36
    %p45 = scmp.eq.s32.totalorder %s14, 1
    %p46 = por %p44, %p45
    %p47 = scmp.ne.s32.totalorder %s36, %s37
    %p48 = scmp.eq.s32.totalorder %s14, 0
    %p49 = por %p47, %p48
    %p50 = scmp.ne.s32.totalorder %s36, %s37
    %p51 = scmp.eq.s32.totalorder %s15, 1
    %p52 = por %p50, %p51
    %p54 = scmp.ne.s32.totalorder %s37, %s53
    %p55 = scmp.eq.s32.totalorder %s15, 0
    %p56 = por %p54, %p55
    %s57 = ssub.s32 %s16, %s28
    %p58 = scmp.eq.s32.totalorder %s57, 0
    %s60 = sadd.s32 %s59, 1
    %s61 = scalar_select %p58, %s59, %s60
    %p64 = pneg %p58
    %p65 = scmp.eq.s32.totalorder %s9, 1
    %p66 = por %p64, %p65
    %p67 = scmp.ne.s32.totalorder %s59, %s62
    %p68 = scmp.eq.s32.totalorder %s9, 0
    %p69 = por %p67, %p68
    %p70 = scmp.ne.s32.totalorder %s59, %s62
    %p71 = scmp.eq.s32.totalorder %s14, 1
    %p72 = por %p70, %p71
    %p73 = scmp.ne.s32.totalorder %s62, %s63
    %p74 = scmp.eq.s32.totalorder %s14, 0
    %p75 = por %p73, %p74
    %p76 = scmp.ne.s32.totalorder %s62, %s63
    %p77 = scmp.eq.s32.totalorder %s15, 1
    %p78 = por %p76, %p77
    %p80 = scmp.ne.s32.totalorder %s63, %s79
    %p81 = scmp.eq.s32.totalorder %s15, 0
    %p82 = por %p80, %p81
    %s83 = ssub.s32 %s16, %s28
    %p84 = scmp.eq.s32.totalorder %s83, 0
    %s86 = sadd.s32 %s85, 1
    %s87 = scalar_select %p84, %s85, %s86
    %p90 = pneg %p84
    %p91 = scmp.eq.s32.totalorder %s9, 1
    %p92 = por %p90, %p91
    %p93 = scmp.ne.s32.totalorder %s85, %s88
    %p94 = scmp.eq.s32.totalorder %s9, 0
    %p95 = por %p93, %p94
    %p96 = scmp.ne.s32.totalorder %s85, %s88
    %p97 = scmp.eq.s32.totalorder %s14, 1
    %p98 = por %p96, %p97
    %p99 = scmp.ne.s32.totalorder %s88, %s89
    %p100 = scmp.eq.s32.totalorder %s14, 0
    %p101 = por %p99, %p100
    %p102 = scmp.ne.s32.totalorder %s88, %s89
    %p103 = scmp.eq.s32.totalorder %s15, 1
    %p104 = por %p102, %p103
    %p106 = scmp.ne.s32.totalorder %s89, %s105
    %p107 = scmp.eq.s32.totalorder %s15, 0
    %p108 = por %p106, %p107
    %p109 = scmp.le.s32.totalorder 1, %s9
    %p110 = scmp.lt.s32.totalorder %s9, 3
    %p111 = pnand %p109, %p110
    %p112 = pneg %p111
    // Predicated region
    $region9: #{cbn2d_forward.2} parent=5 // pred_check
      _
    $region10: #{cbn2d_forward.2} parent=5 // pred_check_branch
      %114 = sbr.rel (%p111) target = $region12
    $region11: #{cbn2d_forward.2} parent=5 // pred_region
      %s115 = ssub.s32 %s9, 1
    $region12: #{cbn2d_forward.2} parent=5 // pred_fallthru
      _
    %p116 = scmp.lt.s32.totalorder %s9, 2
    // Predicated region
    $region13: #{cbn2d_forward.2} parent=5 // pred_check
      %p117 = pneg %p116
    $region14: #{cbn2d_forward.2} parent=5 // pred_check_branch
      %119 = sbr.rel (%p117) target = $region16
    $region15: #{cbn2d_forward.2} parent=5 // pred_region
      // Predicated region
      $region17: #{cbn2d_forward.2} parent=15 // pred_check
        %p120 = pneg %p43
      $region18: #{cbn2d_forward.2} parent=15 // pred_check_branch
        %122 = sbr.rel (%p120) target = $region20
      $region19: #{cbn2d_forward.2} parent=15 // pred_region
        %s123 = smul.u32 2, %s17
        %p124 = scmp.lt.s32.totalorder %s16, 1
        %s125 = scalar_select %p124, %s16, 1
        %p126 = scmp.lt.s32.totalorder %s123, 1
        %s127 = scalar_select %p126, %s123, 1
        %s128 = smul.addr %s125, 2
        %s129 = sadd.s32 %s127, %s128
        %s130 = smul.addr %s129, 4
        %s131 = scalar_lea.vmem %s0, %s130
        %s132 = smul.u32 2, %s17
      $region20: #{cbn2d_forward.2} parent=15 // pred_fallthru
        _
    $region16: #{cbn2d_forward.2} parent=5 // pred_fallthru
      _
    %p133 = scmp.le.s32.totalorder 1, %s9
    %p134 = scmp.lt.s32.totalorder %s9, 3
    %p135 = pnand %p133, %p134
    %p136 = pneg %p135
    // Predicated region
    $region21: #{cbn2d_forward.2} parent=5 // pred_check
      _
    $region22: #{cbn2d_forward.2} parent=5 // pred_check_branch
      %138 = sbr.rel (%p135) target = $region24
    $region23: #{cbn2d_forward.2} parent=5 // pred_region
      %s139 = ssub.s32 %s9, 1
      %s140 = smul.u32 2, %s19
      %p141 = scmp.lt.s32.totalorder %s18, 1
      %s142 = scalar_select %p141, %s18, 1
      %p143 = scmp.lt.s32.totalorder %s140, 1
      %s144 = scalar_select %p143, %s140, 1
      %s145 = smul.addr %s142, 2
      %s146 = sadd.s32 %s144, %s145
      %s147 = smul.addr %s146, 4
      %s148 = scalar_lea.vmem %s0, %s147
      %p149 = pneg %p49
      %p150 = pneg %p46
      %p151 = pneg %p75
      %p152 = pneg %p72
      %p153 = scmp.lt.s32.totalorder %s18, 1
      %s154 = scalar_select %p153, %s18, 1
      %s155 = smul.addr %s154, 4
      %s156 = scalar_lea.vmem %s1, %s155
      %p157 = pneg %p101
      %p158 = pneg %p98
      %p159 = scmp.lt.s32.totalorder %s18, 1
      %s160 = scalar_select %p159, %s18, 1
      %s161 = smul.addr %s160, 4
      %s162 = scalar_lea.vmem %s2, %s161
      %s163 = smul.u32 2, %s19
      %p164 = scmp.lt.s32.totalorder %s18, 1
      %s165 = scalar_select %p164, %s18, 1
      %p166 = scmp.lt.s32.totalorder %s163, 1
      %s167 = scalar_select %p166, %s163, 1
      %s168 = smul.addr %s165, 2
      %s169 = sadd.s32 %s167, %s168
      %s170 = smul.addr %s169, 4
      %s171 = scalar_lea.vmem %s0, %s170
      %s172 = smul.u32 2, %s19
      %p173 = scmp.lt.s32.totalorder %s18, 1
      %s174 = scalar_select %p173, %s18, 1
      %s175 = smul.addr %s174, 4
      %s176 = scalar_lea.vmem %s1, %s175
      %p177 = scmp.lt.s32.totalorder %s18, 1
      %s178 = scalar_select %p177, %s18, 1
      %s179 = smul.addr %s178, 4
      %s180 = scalar_lea.vmem %s2, %s179
      %p181 = scmp.eq.s32.totalorder %s19, 0
      // Predicated region
      $region25: #{cbn2d_forward.2} parent=23 // pred_check
        %p182 = pneg %p181
      $region26: #{cbn2d_forward.2} parent=23 // pred_check_branch
        %184 = sbr.rel (%p182) target = $region28
      $region27: #{cbn2d_forward.2} parent=23 // pred_region
        %vm185 = vcmask 3072
        %186 = vst.msk [vmem:[%s176] sm:$0xf] %vm185, 0.0
        %187 = vst.msk [vmem:[%s180] sm:$0xf] %vm185, 0.0
      $region28: #{cbn2d_forward.2} parent=23 // pred_fallthru
        _
      %v188 = vld [vmem:[%s171] sm:$0xff]
      %v189 = vld [vmem:[%s176] sm:$0xf]
      %191 = vst [vmem:[#allocation1] ss:$2 sm:$0xff] %v188
      %v192 = vld.sshfl [vmem:[#allocation1] sm:$0xff pattern:$0x75316420]
      %v193 = vld.sshfl [vmem:[#allocation1 + $0x8] sm:$0xff pattern:$0x75316420]
      %vm196 = vcmask 1043456
      %v197 = vsel %vm196, %v192, 0.0
      %v198 = vsel %vm196, %v193, 0.0
      %v199 = vadd.f32 %v197, %v198
      %200 = vadd.xlane.f32.xlu0 %v199
      %v201 = vpop.xlane.xlu0 %200
      %v202 = vadd.f32 %v189, %v201
      %vm203 = vcmask 3072
      %204 = vst.msk [vmem:[%s176] sm:$0xf] %vm203, %v202
      %v205 = vld [vmem:[%s180] sm:$0xf]
      %v206 = vmul.f32 %v188, %v188
      %208 = vst [vmem:[#allocation1] ss:$2 sm:$0xff] %v206
      %v209 = vld.sshfl [vmem:[#allocation1] sm:$0xff pattern:$0x75316420]
      %v210 = vld.sshfl [vmem:[#allocation1 + $0x8] sm:$0xff pattern:$0x75316420]
      %v213 = vsel %vm196, %v209, 0.0
      %v214 = vsel %vm196, %v210, 0.0
      %v215 = vadd.f32 %v213, %v214
      %216 = vadd.xlane.f32.xlu0 %v215
      %v217 = vpop.xlane.xlu0 %216
      %v218 = vadd.f32 %v205, %v217
      %219 = vst.msk [vmem:[%s180] sm:$0xf] %vm203, %v218
      %p220 = scmp.lt.s32.totalorder %s18, 1
      %s221 = scalar_select %p220, %s18, 1
      %s222 = smul.addr %s221, 4
      %s223 = scalar_lea.vmem %s1, %s222
      %p224 = scmp.lt.s32.totalorder %s18, 1
      %s225 = scalar_select %p224, %s18, 1
      %s226 = smul.addr %s225, 4
      %s227 = scalar_lea.vmem %s2, %s226
      // Predicated region
      $region29: #{cbn2d_forward.2} parent=23 // pred_check
        %p228 = pneg %p72
      $region30: #{cbn2d_forward.2} parent=23 // pred_check_branch
        %230 = sbr.rel (%p228) target = $region32
      $region31: #{cbn2d_forward.2} parent=23 // pred_region
        _
      $region32: #{cbn2d_forward.2} parent=23 // pred_fallthru
        _
      // Predicated region
      $region33: #{cbn2d_forward.2} parent=23 // pred_check
        %p231 = pneg %p98
      $region34: #{cbn2d_forward.2} parent=23 // pred_check_branch
        %233 = sbr.rel (%p231) target = $region36
      $region35: #{cbn2d_forward.2} parent=23 // pred_region
        _
      $region36: #{cbn2d_forward.2} parent=23 // pred_fallthru
        _
    $region24: #{cbn2d_forward.2} parent=5 // pred_fallthru
      _
    %p234 = scmp.le.s32.totalorder 2, %s9
    // Predicated region
    $region37: #{cbn2d_forward.2} parent=5 // pred_check
      %p235 = pneg %p234
    $region38: #{cbn2d_forward.2} parent=5 // pred_check_branch
      %237 = sbr.rel (%p235) target = $region40
    $region39: #{cbn2d_forward.2} parent=5 // pred_region
      %s238 = ssub.s32 %s9, 2
      // Predicated region
      $region41: #{cbn2d_forward.2} parent=39 // pred_check
        %p239 = pneg %p78
      $region42: #{cbn2d_forward.2} parent=39 // pred_check_branch
        %241 = sbr.rel (%p239) target = $region44
      $region43: #{cbn2d_forward.2} parent=39 // pred_region
        %p242 = scmp.lt.s32.totalorder %s20, 1
        %s243 = scalar_select %p242, %s20, 1
        %s244 = smul.addr %s243, 4
        %s245 = scalar_lea.vmem %s1, %s244
      $region44: #{cbn2d_forward.2} parent=39 // pred_fallthru
        _
      // Predicated region
      $region45: #{cbn2d_forward.2} parent=39 // pred_check
        %p246 = pneg %p104
      $region46: #{cbn2d_forward.2} parent=39 // pred_check_branch
        %248 = sbr.rel (%p246) target = $region48
      $region47: #{cbn2d_forward.2} parent=39 // pred_region
        %p249 = scmp.lt.s32.totalorder %s20, 1
        %s250 = scalar_select %p249, %s20, 1
        %s251 = smul.addr %s250, 4
        %s252 = scalar_lea.vmem %s2, %s251
      $region48: #{cbn2d_forward.2} parent=39 // pred_fallthru
        _
    $region40: #{cbn2d_forward.2} parent=5 // pred_fallthru
      _
  $region6: #{cbn2d_forward.2} parent=0 // loop_footer
    %s13 = sadd.s32 1, %s9
  $region7: #{cbn2d_forward.2} parent=0 // loop_footer_branch
    %8 = sbr.rel target = $region3
  $region8: #{cbn2d_forward.2} parent=0 // loop_exit
    _

</llo_original>
